<compile_context>
chip_gen: v6e
topology: v6e:2x2x1
jax: 0.10.0
libtpu: 0.0.40
codegen_flags: <defaults>
</compile_context>

<pallas_src>
import jax
import jax.numpy as jnp
from jax.experimental import pallas as pl
from jax.experimental.pallas import tpu as pltpu


def _round_up(n, m):
    return ((n + m - 1) // m) * m


def dueling_q_kernel(x_ref, w1_ref, b1_ref, w2_ref, b2_ref,
                     wva_ref, bva_ref, q_ref):
    # Hidden layer 1: (TB, S)bf16 @ (S, 64)bf16 -> f32, bias + ReLU in f32.
    h1 = jnp.dot(x_ref[...], w1_ref[...], preferred_element_type=jnp.float32)
    h1 = jnp.maximum(h1 + b1_ref[...], 0.0)

    # Hidden layer 2: (TB, 64) @ (64, 32) -> f32, bias + ReLU in f32.
    h2 = jnp.dot(h1.astype(jnp.bfloat16), w2_ref[...],
                 preferred_element_type=jnp.float32)
    h2 = jnp.maximum(h2 + b2_ref[...], 0.0)

    # Fused value+advantage head: (TB, 32) @ (32, 1+A) -> (TB, 1+A).
    head = jnp.dot(h2.astype(jnp.bfloat16), wva_ref[...],
                   preferred_element_type=jnp.float32)
    head = head + bva_ref[...]

    v = head[:, 0:1]      # (TB, 1)
    a = head[:, 1:]       # (TB, A)  -- mean taken only over the true A columns
    a_mean = jnp.mean(a, axis=-1, keepdims=True)
    q_ref[...] = (v + (a - a_mean)).astype(q_ref.dtype)


def pack_params(params):
    """One-time host-side packing: fuse V/A heads, cast weights to bf16."""
    w1, b1, w2, b2, wv, bv, wa, ba = params
    wva = jnp.concatenate([wv, wa], axis=1)   # (32, 1+A)
    bva = jnp.concatenate([bv, ba], axis=1)   # (1, 1+A)
    return (w1.astype(jnp.bfloat16), b1.astype(jnp.float32),
            w2.astype(jnp.bfloat16), b2.astype(jnp.float32),
            wva.astype(jnp.bfloat16), bva.astype(jnp.float32))


def dueling_q_forward(x, packed_params, *, block_b=1024):
    w1, b1, w2, b2, wva, bva = packed_params
    B, S = x.shape
    A = wva.shape[1] - 1

    # Batch tile: multiple of 8 sublanes, capped at block_b; pad B up to it.
    tb = min(block_b, _round_up(B, 8))
    b_pad = _round_up(B, tb)

    x = x.astype(jnp.bfloat16)
    if b_pad != B:
        x = jnp.pad(x, ((0, b_pad - B), (0, 0)))

    def resident(shape):
        # Same block for every grid step -> weight stays resident in VMEM.
        return pl.BlockSpec(shape, lambda i: (0,) * len(shape))

    q = pl.pallas_call(
        dueling_q_kernel,
        out_shape=jax.ShapeDtypeStruct((b_pad, A), jnp.float32),
        grid=(b_pad // tb,),
        in_specs=[
            pl.BlockSpec((tb, S), lambda i: (i, 0)),   # x: streamed per tile
            resident(w1.shape), resident(b1.shape),
            resident(w2.shape), resident(b2.shape),
            resident(wva.shape), resident(bva.shape),
        ],
        out_specs=pl.BlockSpec((tb, A), lambda i: (i, 0)),
        compiler_params=pltpu.CompilerParams(
            dimension_semantics=("parallel",)),
    )(x, w1, b1, w2, b2, wva, bva)

    return q[:B]


def init_params(key, state_space, action_space):
    """Deterministic init mimicking nn.Linear default (uniform +/- 1/sqrt(fan_in))."""
    def linear(key, fan_in, fan_out):
        kw, kb = jax.random.split(key)
        bound = 1.0 / jnp.sqrt(fan_in)
        w = jax.random.uniform(kw, (fan_in, fan_out), jnp.float32, -bound, bound)
        b = jax.random.uniform(kb, (1, fan_out), jnp.float32, -bound, bound)
        return w, b

    k1, k2, k3, k4 = jax.random.split(key, 4)
    w1, b1 = linear(k1, state_space, 64)
    w2, b2 = linear(k2, 64, 32)
    wv, bv = linear(k3, 32, 1)
    wa, ba = linear(k4, 32, action_space)
    return (w1, b1, w2, b2, wv, bv, wa, ba)


def dueling_q_reference(x, params):
    """Reference matching the kernel's mixed precision (bf16 matmul inputs, f32 acc)."""
    w1, b1, w2, b2, wv, bv, wa, ba = params
    bf = lambda t: t.astype(jnp.bfloat16).astype(jnp.float32)
    h1 = jnp.maximum(bf(x) @ bf(w1) + b1, 0.0)
    h2 = jnp.maximum(bf(h1) @ bf(w2) + b2, 0.0)
    v = bf(h2) @ bf(wv) + bv
    a = bf(h2) @ bf(wa) + ba
    return v + (a - jnp.mean(a, axis=-1, keepdims=True))


if __name__ == "__main__":
    key = jax.random.PRNGKey(0)
    k_params, k_x1, k_x2 = jax.random.split(key, 3)

    state_space = 8
    action_space = 4

    params = init_params(k_params, state_space, action_space)
    packed = pack_params(params)

    # Small batch (grid of 1, padded 2 -> 8 rows).
    batch = 2
    x = jax.random.normal(k_x1, (batch, state_space), jnp.float32)
    q = jax.block_until_ready(dueling_q_forward(x, packed))
    q_ref = dueling_q_reference(x, params)
    assert q.shape == (batch, action_space)
    assert jnp.allclose(q, q_ref, atol=1e-4, rtol=1e-4)

    # Larger batch exercising multi-tile grid + batch padding (300 -> 384, 3 tiles).
    batch2 = 300
    x2 = jax.random.normal(k_x2, (batch2, state_space), jnp.float32)
    q2 = jax.block_until_ready(dueling_q_forward(x2, packed, block_b=128))
    q2_ref = dueling_q_reference(x2, params)
    assert q2.shape == (batch2, action_space)
    assert jnp.allclose(q2, q2_ref, atol=1e-4, rtol=1e-4)

    print("KERNEL_OK")
</pallas_src>

<mosaic_0001>
module attributes {stable_mosaic.version = 11 : i64} {
  func.func @dueling_q_kernel(%arg0: i32, %arg1: memref<8x8xbf16, #tpu.memory_space<vmem>>, %arg2: memref<8x64xbf16, #tpu.memory_space<vmem>>, %arg3: memref<1x64xf32, #tpu.memory_space<vmem>>, %arg4: memref<64x32xbf16, #tpu.memory_space<vmem>>, %arg5: memref<1x32xf32, #tpu.memory_space<vmem>>, %arg6: memref<32x5xbf16, #tpu.memory_space<vmem>>, %arg7: memref<1x5xf32, #tpu.memory_space<vmem>>, %arg8: memref<8x4xf32, #tpu.memory_space<vmem>>) attributes {dimension_semantics = [#tpu.dimension_semantics<parallel>], iteration_bounds = array<i64: 1>, scalar_prefetch = 0 : i64, scratch_operands = 0 : i64, tpu.core_type = #tpu.core_type<tc>, window_params = [{transform_indices = @transform_0, window_bounds = array<i64: 8, 8>}, {pipeline_mode = #tpu.pipeline_mode<synchronous>, transform_indices = @transform_1, window_bounds = array<i64: 8, 64>}, {pipeline_mode = #tpu.pipeline_mode<synchronous>, transform_indices = @transform_2, window_bounds = array<i64: 1, 64>}, {pipeline_mode = #tpu.pipeline_mode<synchronous>, transform_indices = @transform_3, window_bounds = array<i64: 64, 32>}, {pipeline_mode = #tpu.pipeline_mode<synchronous>, transform_indices = @transform_4, window_bounds = array<i64: 1, 32>}, {pipeline_mode = #tpu.pipeline_mode<synchronous>, transform_indices = @transform_5, window_bounds = array<i64: 32, 5>}, {pipeline_mode = #tpu.pipeline_mode<synchronous>, transform_indices = @transform_6, window_bounds = array<i64: 1, 5>}, {transform_indices = @transform_7, window_bounds = array<i64: 8, 4>}]} {
    %c0 = arith.constant 0 : index
    %c0_0 = arith.constant 0 : index
    %0 = vector.load %arg1[%c0, %c0_0] : memref<8x8xbf16, #tpu.memory_space<vmem>>, vector<8x8xbf16>
    %c0_1 = arith.constant 0 : index
    %c0_2 = arith.constant 0 : index
    %1 = vector.load %arg2[%c0_1, %c0_2] : memref<8x64xbf16, #tpu.memory_space<vmem>>, vector<8x64xbf16>
    %cst = arith.constant dense<0.000000e+00> : vector<8x64xf32>
    %2 = tpu.matmul %0, %1, %cst {dimension_numbers = #tpu.dot_dimension_numbers<[1], [0], [0], [1], [0, 0, 1, 1], [], []>} : vector<8x8xbf16>, vector<8x64xbf16>, vector<8x64xf32> -> vector<8x64xf32>
    %c0_3 = arith.constant 0 : index
    %c0_4 = arith.constant 0 : index
    %3 = vector.load %arg3[%c0_3, %c0_4] : memref<1x64xf32, #tpu.memory_space<vmem>>, vector<1x64xf32>
    %4 = vector.broadcast %3 : vector<1x64xf32> to vector<8x64xf32>
    %5 = arith.addf %2, %4 : vector<8x64xf32>
    %cst_5 = arith.constant 0.000000e+00 : f32
    %6 = vector.broadcast %cst_5 : f32 to vector<8x64xf32>
    %7 = arith.maximumf %5, %6 : vector<8x64xf32>
    %8 = arith.truncf %7 : vector<8x64xf32> to vector<8x64xbf16>
    %c0_6 = arith.constant 0 : index
    %c0_7 = arith.constant 0 : index
    %9 = vector.load %arg4[%c0_6, %c0_7] : memref<64x32xbf16, #tpu.memory_space<vmem>>, vector<64x32xbf16>
    %cst_8 = arith.constant dense<0.000000e+00> : vector<8x32xf32>
    %10 = tpu.matmul %8, %9, %cst_8 {dimension_numbers = #tpu.dot_dimension_numbers<[1], [0], [0], [1], [0, 0, 1, 1], [], []>} : vector<8x64xbf16>, vector<64x32xbf16>, vector<8x32xf32> -> vector<8x32xf32>
    %c0_9 = arith.constant 0 : index
    %c0_10 = arith.constant 0 : index
    %11 = vector.load %arg5[%c0_9, %c0_10] : memref<1x32xf32, #tpu.memory_space<vmem>>, vector<1x32xf32>
    %12 = vector.broadcast %11 : vector<1x32xf32> to vector<8x32xf32>
    %13 = arith.addf %10, %12 : vector<8x32xf32>
    %cst_11 = arith.constant 0.000000e+00 : f32
    %14 = vector.broadcast %cst_11 : f32 to vector<8x32xf32>
    %15 = arith.maximumf %13, %14 : vector<8x32xf32>
    %16 = arith.truncf %15 : vector<8x32xf32> to vector<8x32xbf16>
    %c0_12 = arith.constant 0 : index
    %c0_13 = arith.constant 0 : index
    %17 = vector.load %arg6[%c0_12, %c0_13] : memref<32x5xbf16, #tpu.memory_space<vmem>>, vector<32x5xbf16>
    %cst_14 = arith.constant dense<0.000000e+00> : vector<8x5xf32>
    %18 = tpu.matmul %16, %17, %cst_14 {dimension_numbers = #tpu.dot_dimension_numbers<[1], [0], [0], [1], [0, 0, 1, 1], [], []>} : vector<8x32xbf16>, vector<32x5xbf16>, vector<8x5xf32> -> vector<8x5xf32>
    %c0_15 = arith.constant 0 : index
    %c0_16 = arith.constant 0 : index
    %19 = vector.load %arg7[%c0_15, %c0_16] : memref<1x5xf32, #tpu.memory_space<vmem>>, vector<1x5xf32>
    %20 = vector.broadcast %19 : vector<1x5xf32> to vector<8x5xf32>
    %21 = arith.addf %18, %20 : vector<8x5xf32>
    %22 = vector.extract_strided_slice %21 {offsets = [0, 0], sizes = [8, 1], strides = [1, 1]} : vector<8x5xf32> to vector<8x1xf32>
    %23 = vector.extract_strided_slice %21 {offsets = [0, 1], sizes = [8, 4], strides = [1, 1]} : vector<8x5xf32> to vector<8x4xf32>
    %cst_17 = arith.constant dense<0.000000e+00> : vector<8xf32>
    %24 = vector.multi_reduction <add>, %23, %cst_17 [1] : vector<8x4xf32> to vector<8xf32>
    %25 = vector.shape_cast %24 : vector<8xf32> to vector<8x1xf32>
    %cst_18 = arith.constant 4.000000e+00 : f32
    %26 = vector.broadcast %cst_18 : f32 to vector<8x1xf32>
    %27 = arith.divf %25, %26 : vector<8x1xf32>
    %28 = vector.broadcast %27 : vector<8x1xf32> to vector<8x4xf32>
    %29 = arith.subf %23, %28 : vector<8x4xf32>
    %30 = vector.broadcast %22 : vector<8x1xf32> to vector<8x4xf32>
    %31 = arith.addf %30, %29 : vector<8x4xf32>
    %c0_19 = arith.constant 0 : index
    %c0_20 = arith.constant 0 : index
    %32 = vector.load %arg8[%c0_19, %c0_20] : memref<8x4xf32, #tpu.memory_space<vmem>>, vector<8x4xf32>
    tpu.vector_store %arg8[%c0_19, %c0_20], %31 {strides = array<i32>} : memref<8x4xf32, #tpu.memory_space<vmem>>, vector<8x4xf32>,
    return
  }
  func.func @transform_0(%arg0: i32) -> (i32, i32) {
    %c0_i32 = arith.constant 0 : i32
    %c0_i32_0 = arith.constant 0 : i32
    return %arg0, %c0_i32 : i32, i32
  }
  func.func @transform_1(%arg0: i32) -> (i32, i32) {
    %c0_i32 = arith.constant 0 : i32
    %c0_i32_0 = arith.constant 0 : i32
    %c0_i32_1 = arith.constant 0 : i32
    return %c0_i32, %c0_i32_0 : i32, i32
  }
  func.func @transform_2(%arg0: i32) -> (i32, i32) {
    %c0_i32 = arith.constant 0 : i32
    %c0_i32_0 = arith.constant 0 : i32
    %c0_i32_1 = arith.constant 0 : i32
    return %c0_i32, %c0_i32_0 : i32, i32
  }
  func.func @transform_3(%arg0: i32) -> (i32, i32) {
    %c0_i32 = arith.constant 0 : i32
    %c0_i32_0 = arith.constant 0 : i32
    %c0_i32_1 = arith.constant 0 : i32
    return %c0_i32, %c0_i32_0 : i32, i32
  }
  func.func @transform_4(%arg0: i32) -> (i32, i32) {
    %c0_i32 = arith.constant 0 : i32
    %c0_i32_0 = arith.constant 0 : i32
    %c0_i32_1 = arith.constant 0 : i32
    return %c0_i32, %c0_i32_0 : i32, i32
  }
  func.func @transform_5(%arg0: i32) -> (i32, i32) {
    %c0_i32 = arith.constant 0 : i32
    %c0_i32_0 = arith.constant 0 : i32
    %c0_i32_1 = arith.constant 0 : i32
    return %c0_i32, %c0_i32_0 : i32, i32
  }
  func.func @transform_6(%arg0: i32) -> (i32, i32) {
    %c0_i32 = arith.constant 0 : i32
    %c0_i32_0 = arith.constant 0 : i32
    %c0_i32_1 = arith.constant 0 : i32
    return %c0_i32, %c0_i32_0 : i32, i32
  }
  func.func @transform_7(%arg0: i32) -> (i32, i32) {
    %c0_i32 = arith.constant 0 : i32
    %c0_i32_0 = arith.constant 0 : i32
    return %arg0, %c0_i32 : i32, i32
  }
}

</mosaic_0001>

<llo_original>
// kernel: tpu_custom_call.1
$region0: #{tpu_custom_call.1}
  #allocation0 [shape = 'u32[]', space=smem, size = 0x4, offset = 0x4, fixed_abs, tag = 'smem constant byte address 0x4 - core index']
  #allocation1 [shape = 'u32[144,128]{1,0:T(1,128)}', space=vmem, size = 0x12000, scoped, tag = 'internal scratch']
  %s0 = inlined_call_operand.vmem [shape: bf16[8,8], index: 0, kind: input, shape index: {}]
  %s1 = inlined_call_operand.vmem [shape: bf16[8,64], index: 1, kind: input, shape index: {}]
  %s2 = inlined_call_operand.vmem [shape: f32[1,64], index: 2, kind: input, shape index: {}]
  %s3 = inlined_call_operand.vmem [shape: bf16[64,32], index: 3, kind: input, shape index: {}]
  %s4 = inlined_call_operand.vmem [shape: f32[1,32], index: 4, kind: input, shape index: {}]
  %s5 = inlined_call_operand.vmem [shape: bf16[32,5], index: 5, kind: input, shape index: {}]
  %s6 = inlined_call_operand.vmem [shape: f32[1,5], index: 6, kind: input, shape index: {}]
  %s7 = inlined_call_operand.vmem [shape: f32[8,4], index: 7, kind: output, shape index: {}]
  %s8 = sld [smem:[#allocation0]]
  $region38: #{tpu_custom_call.1} parent=0
    _
  %s10 = ssub.s32 1, %s8
  %s11 = scalar_select 0, %s10, %s8
  // Predicated region
  $region2: #{tpu_custom_call.1} parent=0 // pred_check
    _
  $region3: #{tpu_custom_call.1} parent=0 // pred_check_branch
    %13 = sbr.rel (0) target = $region5
  $region4: #{tpu_custom_call.1} parent=0 // pred_region
    _
  $region5: #{tpu_custom_call.1} parent=0 // pred_fallthru
    _
  // Predicated region
  $region6: #{tpu_custom_call.1} parent=0 // pred_check
    _
  $region7: #{tpu_custom_call.1} parent=0 // pred_check_branch
    %15 = sbr.rel (0) target = $region9
  $region8: #{tpu_custom_call.1} parent=0 // pred_region
    _
  $region9: #{tpu_custom_call.1} parent=0 // pred_fallthru
    _
  // Predicated region
  $region10: #{tpu_custom_call.1} parent=0 // pred_check
    _
  $region11: #{tpu_custom_call.1} parent=0 // pred_check_branch
    %17 = sbr.rel (0) target = $region13
  $region12: #{tpu_custom_call.1} parent=0 // pred_region
    _
  $region13: #{tpu_custom_call.1} parent=0 // pred_fallthru
    _
  // Predicated region
  $region14: #{tpu_custom_call.1} parent=0 // pred_check
    _
  $region15: #{tpu_custom_call.1} parent=0 // pred_check_branch
    %19 = sbr.rel (0) target = $region17
  $region16: #{tpu_custom_call.1} parent=0 // pred_region
    _
  $region17: #{tpu_custom_call.1} parent=0 // pred_fallthru
    _
  // Predicated region
  $region18: #{tpu_custom_call.1} parent=0 // pred_check
    _
  $region19: #{tpu_custom_call.1} parent=0 // pred_check_branch
    %21 = sbr.rel (0) target = $region21
  $region20: #{tpu_custom_call.1} parent=0 // pred_region
    _
  $region21: #{tpu_custom_call.1} parent=0 // pred_fallthru
    _
  // Predicated region
  $region22: #{tpu_custom_call.1} parent=0 // pred_check
    _
  $region23: #{tpu_custom_call.1} parent=0 // pred_check_branch
    %23 = sbr.rel (0) target = $region25
  $region24: #{tpu_custom_call.1} parent=0 // pred_region
    _
  $region25: #{tpu_custom_call.1} parent=0 // pred_fallthru
    _
  // Predicated region
  $region26: #{tpu_custom_call.1} parent=0 // pred_check
    _
  $region27: #{tpu_custom_call.1} parent=0 // pred_check_branch
    %25 = sbr.rel (0) target = $region29
  $region28: #{tpu_custom_call.1} parent=0 // pred_region
    _
  $region29: #{tpu_custom_call.1} parent=0 // pred_fallthru
    _
  %v27 = vld [vmem:[%s0] sm:$0xf]
  %v28 = vld [vmem:[%s1] sm:$0xf]
  %v29 = vld [vmem:[%s2] sm:$0x1]
  %v31 = vlaneseq
  %v32 = vshrl.u32 %v31, 7
  %v33 = vsub.s32 0, %v32
  %v34 = vrot.slane %v29, %v33
  %vm36 = vcmask 64512
  %v38 = vsel %vm36, %v27, 0
  %vm40 = vcmask 1043456
  %v42 = vsel %vm40, %v28, 0
  %44 = vmatprep.subr.bf16.mxu0 0
  %45 = vmatpush1.bf16.msra.mxu0 0
  %46 = vmatprep.subr.bf16.mxu0 0
  %47 = vmatpush1.bf16.msra.mxu0 0
  %48 = vmatprep.subr.bf16.mxu0 0
  %49 = vmatpush1.bf16.msra.mxu0 0
  %50 = vmatprep.subr.bf16.mxu0 0
  %51 = vmatpush1.bf16.msra.mxu0 0
  %52 = vmatprep.subr.bf16.mxu0 0
  %53 = vmatpush1.bf16.msra.mxu0 0
  %54 = vmatprep.subr.bf16.mxu0 0
  %55 = vmatpush1.bf16.msra.mxu0 0
  %56 = vmatprep.subr.bf16.mxu0 0
  %57 = vmatpush1.bf16.msra.mxu0 0
  %58 = vmatprep.subr.bf16.mxu0 0
  %59 = vmatpush1.bf16.msra.mxu0 %v42
  %60 = vmatprep.subr.bf16.mxu0 0
  %61 = vmatpush2.bf16.msra.mxu0 0
  %62 = vmatprep.subr.bf16.mxu0 0
  %63 = vmatpush2.bf16.msra.mxu0 0
  %64 = vmatprep.subr.bf16.mxu0 0
  %65 = vmatpush2.bf16.msra.mxu0 0
  %66 = vmatprep.subr.bf16.mxu0 0
  %67 = vmatpush2.bf16.msra.mxu0 0
  %68 = vmatprep.subr.bf16.mxu0 0
  %69 = vmatpush2.bf16.msra.mxu0 0
  %70 = vmatprep.subr.bf16.mxu0 0
  %71 = vmatpush2.bf16.msra.mxu0 0
  %72 = vmatprep.subr.bf16.mxu0 0
  %73 = vmatpush2.bf16.msra.mxu0 0
  %74 = vmatprep.subr.bf16.mxu0 0
  %75 = vmatpush2.bf16.msra.mxu0 0
  %76 = vmatprep.mubr.bf16.mxu0 0
  %77 = vmatmul.mubr.bf16.gmra.mxu0 %v38
  %v78 = vpop.f32.mrf.mxu0
  %v79 = vadd.f32 %v34, %v78
  %v80 = vpop.f32.mrf.mxu0
  %v81 = vpop.f32.mrf.mxu0
  %v82 = vpop.f32.mrf.mxu0
  %83 = vdwg.mxu0
  %v84 = vmax.f32 %v79, 0.0
  %v85 = vpack.c.bf16 %v84, %v84
  %v86 = vld [vmem:[%s3] sm:$0xf]
  %v87 = vld [vmem:[%s3 + $0x4] sm:$0xf]
  %v88 = vld [vmem:[%s3 + $0x8] sm:$0xf]
  %v89 = vld [vmem:[%s3 + $0xc] sm:$0xf]
  %v90 = vld [vmem:[%s3 + $0x10] sm:$0xf]
  %v91 = vld [vmem:[%s3 + $0x14] sm:$0xf]
  %v92 = vld [vmem:[%s3 + $0x18] sm:$0xf]
  %v93 = vld [vmem:[%s3 + $0x1c] sm:$0xf]
  %v94 = vld [vmem:[%s4] sm:$0x1]
  %v96 = vlaneseq
  %v97 = vshrl.u32 %v96, 7
  %v98 = vsub.s32 0, %v97
  %v99 = vrot.slane %v94, %v98
  %v109 = vunpack.c.l.b16 %v86
  %v110 = vunpack.c.l.b16 %v87
  %v111 = vunpack.c.l.b16 %v88
  %v112 = vunpack.c.l.b16 %v89
  %v113 = vunpack.c.l.b16 %v90
  %v114 = vunpack.c.l.b16 %v91
  %v115 = vunpack.c.l.b16 %v92
  %v116 = vunpack.c.l.b16 %v93
  %v117 = vpack.c.b16 %v110, %v109
  %v118 = vpack.c.b16 %v112, %v111
  %v119 = vpack.c.b16 %v114, %v113
  %v120 = vpack.c.b16 %v116, %v115
  %vm125 = vcmask 523264
  %v127 = vsel %vm125, %v85, 0
  %129 = vmatprep.subr.bf16.mxu0 0
  %130 = vmatpush1.bf16.msra.mxu0 0
  %131 = vmatprep.subr.bf16.mxu0 0
  %132 = vmatpush1.bf16.msra.mxu0 0
  %133 = vmatprep.subr.bf16.mxu0 0
  %134 = vmatpush1.bf16.msra.mxu0 0
  %135 = vmatprep.subr.bf16.mxu0 0
  %136 = vmatpush1.bf16.msra.mxu0 0
  %137 = vmatprep.subr.bf16.mxu0 0
  %138 = vmatpush1.bf16.msra.mxu0 %v120
  %139 = vmatprep.subr.bf16.mxu0 0
  %140 = vmatpush1.bf16.msra.mxu0 %v119
  %141 = vmatprep.subr.bf16.mxu0 0
  %142 = vmatpush1.bf16.msra.mxu0 %v118
  %143 = vmatprep.subr.bf16.mxu0 0
  %144 = vmatpush1.bf16.msra.mxu0 %v117
  %145 = vmatprep.subr.bf16.mxu0 0
  %146 = vmatpush2.bf16.msra.mxu0 0
  %147 = vmatprep.subr.bf16.mxu0 0
  %148 = vmatpush2.bf16.msra.mxu0 0
  %149 = vmatprep.subr.bf16.mxu0 0
  %150 = vmatpush2.bf16.msra.mxu0 0
  %151 = vmatprep.subr.bf16.mxu0 0
  %152 = vmatpush2.bf16.msra.mxu0 0
  %153 = vmatprep.subr.bf16.mxu0 0
  %154 = vmatpush2.bf16.msra.mxu0 0
  %155 = vmatprep.subr.bf16.mxu0 0
  %156 = vmatpush2.bf16.msra.mxu0 0
  %157 = vmatprep.subr.bf16.mxu0 0
  %158 = vmatpush2.bf16.msra.mxu0 0
  %159 = vmatprep.subr.bf16.mxu0 0
  %160 = vmatpush2.bf16.msra.mxu0 0
  %161 = vmatprep.mubr.bf16.mxu0 0
  %162 = vmatmul.mubr.bf16.gmra.mxu0 %v127
  %v163 = vpop.f32.mrf.mxu0
  %v164 = vadd.f32 %v99, %v163
  %v165 = vpop.f32.mrf.mxu0
  %v166 = vpop.f32.mrf.mxu0
  %v167 = vpop.f32.mrf.mxu0
  %168 = vdwg.mxu0
  %v169 = vmax.f32 %v164, 0.0
  %v170 = vpack.c.bf16 %v169, %v169
  %v171 = vld [vmem:[%s5] sm:$0xf]
  %v172 = vld [vmem:[%s5 + $0x4] sm:$0xf]
  %v173 = vld [vmem:[%s5 + $0x8] sm:$0xf]
  %v174 = vld [vmem:[%s5 + $0xc] sm:$0xf]
  %v175 = vld [vmem:[%s6] sm:$0x1]
  %v177 = vlaneseq
  %v178 = vshrl.u32 %v177, 7
  %v179 = vsub.s32 0, %v178
  %v180 = vrot.slane %v175, %v179
  %v186 = vunpack.c.l.b16 %v171
  %v187 = vunpack.c.l.b16 %v172
  %v188 = vunpack.c.l.b16 %v173
  %v189 = vunpack.c.l.b16 %v174
  %v190 = vpack.c.b16 %v187, %v186
  %v191 = vpack.c.b16 %v189, %v188
  %vm194 = vcmask 261120
  %v196 = vsel %vm194, %v170, 0
  %198 = vmatprep.subr.bf16.mxu0 0
  %199 = vmatpush1.bf16.msra.mxu0 0
  %200 = vmatprep.subr.bf16.mxu0 0
  %201 = vmatpush1.bf16.msra.mxu0 0
  %202 = vmatprep.subr.bf16.mxu0 0
  %203 = vmatpush1.bf16.msra.mxu0 0
  %204 = vmatprep.subr.bf16.mxu0 0
  %205 = vmatpush1.bf16.msra.mxu0 0
  %206 = vmatprep.subr.bf16.mxu0 0
  %207 = vmatpush1.bf16.msra.mxu0 0
  %208 = vmatprep.subr.bf16.mxu0 0
  %209 = vmatpush1.bf16.msra.mxu0 0
  %210 = vmatprep.subr.bf16.mxu0 0
  %211 = vmatpush1.bf16.msra.mxu0 %v191
  %212 = vmatprep.subr.bf16.mxu0 0
  %213 = vmatpush1.bf16.msra.mxu0 %v190
  %214 = vmatprep.subr.bf16.mxu0 0
  %215 = vmatpush2.bf16.msra.mxu0 0
  %216 = vmatprep.subr.bf16.mxu0 0
  %217 = vmatpush2.bf16.msra.mxu0 0
  %218 = vmatprep.subr.bf16.mxu0 0
  %219 = vmatpush2.bf16.msra.mxu0 0
  %220 = vmatprep.subr.bf16.mxu0 0
  %221 = vmatpush2.bf16.msra.mxu0 0
  %222 = vmatprep.subr.bf16.mxu0 0
  %223 = vmatpush2.bf16.msra.mxu0 0
  %224 = vmatprep.subr.bf16.mxu0 0
  %225 = vmatpush2.bf16.msra.mxu0 0
  %226 = vmatprep.subr.bf16.mxu0 0
  %227 = vmatpush2.bf16.msra.mxu0 0
  %228 = vmatprep.subr.bf16.mxu0 0
  %229 = vmatpush2.bf16.msra.mxu0 0
  %230 = vmatprep.mubr.bf16.mxu0 0
  %231 = vmatmul.mubr.bf16.gmra.mxu0 %v196
  %v232 = vpop.f32.mrf.mxu0
  %v233 = vadd.f32 %v180, %v232
  %v234 = vpop.f32.mrf.mxu0
  %v235 = vpop.f32.mrf.mxu0
  %v236 = vpop.f32.mrf.mxu0
  %237 = vdwg.mxu0
  %239 = vrot.lane.b32.xlu0 %v233, 127
  %v240 = vpop.permute.xlu0 %239
  %vm242 = vcmask 31744
  %v243 = vsel %vm242, %v240, 0.0
  %244 = vadd.xlane.f32.xlu0 %v243
  %v245 = vpop.xlane.xlu0 %244
  %v246 = vrcp.pop 4.0
  %v247 = vmul.f32 %v245, %v246
  %v248 = vsub.f32 %v233, %v247
  %249 = vset.pattern.permute.xlu0 0
  %250 = vperm.xlu0 %249, %v233
  %v251 = vpop.permute.xlu0 %250
  %v253 = vadd.f32 %v251, %v248
  %255 = vrot.lane.b32.xlu0 %v253, 127
  %v256 = vpop.permute.xlu0 %255
  %258 = vst.msk [vmem:[%s7] sm:$0xff] %vm242, %v256
  // Predicated region
  $region30: #{tpu_custom_call.1} parent=0 // pred_check
    _
  $region31: #{tpu_custom_call.1} parent=0 // pred_check_branch
    %260 = sbr.rel (0) target = $region33
  $region32: #{tpu_custom_call.1} parent=0 // pred_region
    _
  $region33: #{tpu_custom_call.1} parent=0 // pred_fallthru
    _
  // Predicated region
  $region34: #{tpu_custom_call.1} parent=0 // pred_check
    _
  $region35: #{tpu_custom_call.1} parent=0 // pred_check_branch
    %262 = sbr.rel (0) target = $region37
  $region36: #{tpu_custom_call.1} parent=0 // pred_region
    _
  $region37: #{tpu_custom_call.1} parent=0 // pred_fallthru
    _

</llo_original>
